<compile_context>
chip_gen: v6e
topology: v6e:2x2x1
jax: 0.10.0
libtpu: 0.0.40
codegen_flags: <defaults>
</compile_context>

<pallas_src>
import functools

import numpy as np
import jax
import jax.numpy as jnp
from jax.experimental import pallas as pl
from jax.experimental.pallas import tpu as pltpu


def _make_kernel(C_in, C_out, s, cq, nc, two_x_blocks):
    """Kernel for one (batch n, q-tile i) grid step.

    Emits the phase-major block  o[r*C_out + co, q] = out[n, co, (i*tq + q)*s + r]
    (bias included), computed as nc chunks of cq columns so the live f32 accumulator
    stays at (s*C_out, cq) no matter how large the DMA block tq = nc*cq is.
    """
    M = s * C_out

    def compute(xw, w_ref, b_ref, o_ref):
        bias = b_ref[...]                                    # (M, 1) f32
        for c in range(nc):                                  # static, small
            q0 = c * cq
            # Three taps d=0,1,2 (fused im2col):
            #   acc[r*C_out+co, q] += W[d*C_in+ci, r*C_out+co]
            #                         * x_pad[n, ci, i*tq + q0 + q + d]
            acc = jnp.dot(w_ref[:, 0:C_in], xw[:, q0:q0 + cq],
                          preferred_element_type=jnp.float32)
            for d in (1, 2):
                acc += jnp.dot(w_ref[:, d * C_in:(d + 1) * C_in],
                               xw[:, q0 + d:q0 + d + cq],
                               preferred_element_type=jnp.float32)
            # f32 all the way to a single cast; lane-dense (cq multiple of 128 on the
            # tiled path) unmasked store.
            o_ref[:, q0:q0 + cq] = (acc + bias).astype(o_ref.dtype)

    if two_x_blocks:
        def kernel(xa_ref, xb_ref, w_ref, b_ref, o_ref):
            # +2 halo columns come from the first 128 lanes of the *next* x block
            # (aligned lane concat, both pieces are multiples of 128 wide).
            xw = jnp.concatenate([xa_ref[...], xb_ref[:, :128]], axis=-1)
            compute(xw, w_ref, b_ref, o_ref)
    else:
        def kernel(xa_ref, w_ref, b_ref, o_ref):
            compute(xa_ref[...], w_ref, b_ref, o_ref)

    return kernel


@functools.partial(
    jax.jit,
    static_argnames=("upsample_factor", "q_tile", "compute_dtype", "out_dtype"))
def upsample_net_forward(x, v, g, b, *, upsample_factor, q_tile=2048,
                         compute_dtype=jnp.bfloat16, out_dtype=None):
    """Forward of UpsampleNet:
    weight_norm(ConvTranspose1d(C_in, C_out, 2s, stride=s, padding=s//2)) cropped to L*s.
    """
    N, C_in, L = x.shape
    s = int(upsample_factor)
    K = 2 * s
    p = s // 2
    C_out = v.shape[1]
    M = s * C_out
    if out_dtype is None:
        out_dtype = x.dtype

    # ---- weight norm (dim=0), matches torch.nn.utils.weight_norm ----
    # NOTE: no epsilon, exactly like PyTorch (an all-zero v slice would NaN there too).
    v_norm = jnp.sqrt(jnp.sum(v * v, axis=(1, 2), keepdims=True))
    w_eff = g * v / v_norm                                             # (C_in, C_out, K)

    # ---- phase weight matrix Wm: (3*C_in, s*C_out) ----
    # out[n, co, q*s + r] = sum_{d,ci} x_pad[n, ci, q + d] * Wm[d*C_in+ci, r*C_out+co]
    # with k = r + p + (1 - d) * s, valid iff 0 <= k < K (x_pad = x shifted right by 1).
    rows = []
    for d in range(3):
        cols = []
        for r in range(s):
            k = r + p + (1 - d) * s
            cols.append(w_eff[:, :, k] if 0 <= k < K
                        else jnp.zeros((C_in, C_out), w_eff.dtype))
        rows.append(jnp.concatenate(cols, axis=1))                     # (C_in, s*C_out)
    wm = jnp.concatenate(rows, axis=0)                                 # (3*C_in, M)
    wT = wm.T.astype(compute_dtype)                                    # (M, 3*C_in)
    b_col = jnp.tile(b, s).reshape(M, 1).astype(jnp.float32)           # row r*C_out+co -> b[co]

    # ---- tile selection: big lane-dense DMA blocks, chunked compute ----
    # Cap tq so one f32 phase block stays ~<= 1 MiB: per-step DMA >> the ~0.35us step
    # overhead on all of v5e/v6e/v7x while double-buffered VMEM use stays ~2 MiB.
    tq_cap = max(128, min(4096, ((1 << 20) // (M * 4)) // 128 * 128))
    if L >= 256:
        tq = min(max(128, (min(q_tile, L) // 128) * 128), tq_cap)
        nb = pl.cdiv(L, tq)
        if N == 1 and nb == 1:
            # v7x has 2 TensorCores: guarantee >= 2 "parallel" grid steps.
            tq = max(128, (pl.cdiv(L, 2) // 128) * 128)
            nb = pl.cdiv(L, tq)
    else:
        tq, nb = L, 1          # tiny problem: single full-extent block (few-KiB output)
    L_pad = nb * tq

    if tq % 512 == 0:
        cq = 512
    elif tq % 256 == 0:
        cq = 256
    elif tq % 128 == 0:
        cq = 128
    else:
        cq = tq                # tiny path
    nc = tq // cq

    # ---- x in native NCL layout, shifted + padded for the conv halo & ragged tiles ----
    if nb > 1:
        La = (nb + 1) * tq     # room for the "next block" halo read of the last tile
        bx = tq
    else:
        La = L + 2
        bx = La
    x_arr = jnp.pad(x, ((0, 0), (0, 0), (1, La - L - 1))).astype(compute_dtype)

    kernel = _make_kernel(C_in, C_out, s, cq, nc, two_x_blocks=(nb > 1))

    x_specs = [pl.BlockSpec((None, C_in, bx), lambda n, i: (n, 0, i))]
    operands = [x_arr]
    if nb > 1:                 # halo stream: same array, BlockSpec shifted by one block
        x_specs.append(pl.BlockSpec((None, C_in, bx), lambda n, i: (n, 0, i + 1)))
        operands.append(x_arr)

    out_phase = pl.pallas_call(
        kernel,
        out_shape=jax.ShapeDtypeStruct((N, M, L_pad), out_dtype),
        grid=(N, nb),
        in_specs=x_specs + [
            pl.BlockSpec((M, 3 * C_in), lambda n, i: (0, 0)),   # phase weights (~1.5 KiB)
            pl.BlockSpec((M, 1), lambda n, i: (0, 0)),          # bias
        ],
        out_specs=pl.BlockSpec((None, M, tq), lambda n, i: (n, 0, i)),
        compiler_params=pltpu.CompilerParams(
            dimension_semantics=("parallel", "parallel"),
            vmem_limit_bytes=32 * 1024 * 1024,   # actual use ~2 MiB; headroom to raise q_tile
        ),
    )(*operands, wT, b_col)

    # (s, L) interleave + crop: free reshape + one cheap XLA transpose over the output
    # (<= one extra HBM pass — the trade accepted to drop the M=C_out scatter GEMM).
    out = out_phase.reshape(N, s, C_out, L_pad)[:, :, :, :L]
    out = jnp.transpose(out, (0, 2, 3, 1)).reshape(N, C_out, L * s)
    return out


def _reference_forward(x, v, g, b, s):
    """Pure-numpy reference of weight_norm(ConvTranspose1d) + crop."""
    x = np.asarray(x, np.float64)
    v = np.asarray(v, np.float64)
    g = np.asarray(g, np.float64)
    b = np.asarray(b, np.float64)
    N, C_in, L = x.shape
    C_out = v.shape[1]
    K = 2 * s
    p = s // 2
    w = g * v / np.sqrt(np.sum(v * v, axis=(1, 2), keepdims=True))
    L_full = (L - 1) * s - 2 * p + K
    out = np.zeros((N, C_out, L_full), np.float64)
    for i in range(L):
        for k in range(K):
            t = i * s + k - p
            if 0 <= t < L_full:
                out[:, :, t] += np.einsum('nc,cd->nd', x[:, :, i], w[:, :, k])
    out += b[None, :, None]
    return out[:, :, :L * s]


if __name__ == "__main__":
    # Module config: UpsampleNet(input_size=4, output_size=8, upsample_factor=4)
    C_in, C_out, S = 4, 8, 4

    key = jax.random.PRNGKey(0)
    kx, kv, kg, kb, kx2 = jax.random.split(key, 5)
    v = jax.random.normal(kv, (C_in, C_out, 2 * S), jnp.float32) * 0.1   # weight_v
    g = 1.0 + 0.1 * jax.random.normal(kg, (C_in, 1, 1), jnp.float32)     # weight_g
    b = 0.1 * jax.random.normal(kb, (C_out,), jnp.float32)               # bias

    # ---- small demo shape from the module spec: N=2, C_in=4, L=16 (single block) ----
    N, L = 2, 16
    x = jax.random.normal(kx, (N, C_in, L), jnp.float32)
    y_ref = _reference_forward(x, v, g, b, S)

    # f32 compute path: tight check of the kernel structure.
    y32 = jax.block_until_ready(
        upsample_net_forward(x, v, g, b, upsample_factor=S, compute_dtype=jnp.float32))
    assert y32.shape == (N, C_out, L * S), y32.shape
    np.testing.assert_allclose(np.asarray(y32, np.float64), y_ref, rtol=1e-4, atol=1e-5)

    # bf16 compute path (default): bf16-level tolerance.
    y16 = jax.block_until_ready(upsample_net_forward(x, v, g, b, upsample_factor=S))
    assert y16.shape == (N, C_out, L * S), y16.shape
    np.testing.assert_allclose(np.asarray(y16, np.float64), y_ref, rtol=3e-2, atol=3e-2)

    # ---- tiled path: multi-block halo, ragged-L crop, bf16 output writeback ----
    N2, L2 = 2, 400            # q_tile=128 -> tq=128, nb=4, L_pad=512 (ragged crop)
    x2 = jax.random.normal(kx2, (N2, C_in, L2), jnp.float32)
    y2_ref = _reference_forward(x2, v, g, b, S)

    y2_32 = jax.block_until_ready(
        upsample_net_forward(x2, v, g, b, upsample_factor=S, q_tile=128,
                             compute_dtype=jnp.float32))
    assert y2_32.shape == (N2, C_out, L2 * S), y2_32.shape
    np.testing.assert_allclose(np.asarray(y2_32, np.float64), y2_ref, rtol=2e-4, atol=1e-4)

    y2_16 = jax.block_until_ready(
        upsample_net_forward(x2, v, g, b, upsample_factor=S, q_tile=128,
                             out_dtype=jnp.bfloat16))
    assert y2_16.shape == (N2, C_out, L2 * S), y2_16.shape
    assert y2_16.dtype == jnp.bfloat16
    np.testing.assert_allclose(np.asarray(y2_16, np.float64), y2_ref, rtol=4e-2, atol=4e-2)

    print("KERNEL_OK")
</pallas_src>

<mosaic_0001>
module attributes {stable_mosaic.version = 11 : i64} {
  func.func @kernel(%arg0: i32, %arg1: i32, %arg2: memref<1x4x18xf32, #tpu.memory_space<vmem>>, %arg3: memref<32x12xf32, #tpu.memory_space<vmem>>, %arg4: memref<32x1xf32, #tpu.memory_space<vmem>>, %arg5: memref<1x32x16xf32, #tpu.memory_space<vmem>>) attributes {dimension_semantics = [#tpu.dimension_semantics<parallel>, #tpu.dimension_semantics<parallel>], iteration_bounds = array<i64: 2, 1>, scalar_prefetch = 0 : i64, scratch_operands = 0 : i64, tpu.core_type = #tpu.core_type<tc>, window_params = [{transform_indices = @transform_0, window_bounds = array<i64: 1, 4, 18>}, {pipeline_mode = #tpu.pipeline_mode<synchronous>, transform_indices = @transform_1, window_bounds = array<i64: 32, 12>}, {pipeline_mode = #tpu.pipeline_mode<synchronous>, transform_indices = @transform_2, window_bounds = array<i64: 32, 1>}, {transform_indices = @transform_3, window_bounds = array<i64: 1, 32, 16>}]} {
    %c0 = arith.constant 0 : index
    %c0_0 = arith.constant 0 : index
    %c0_1 = arith.constant 0 : index
    %0 = vector.load %arg2[%c0, %c0_0, %c0_1] : memref<1x4x18xf32, #tpu.memory_space<vmem>>, vector<1x4x18xf32>
    %1 = vector.shape_cast %0 : vector<1x4x18xf32> to vector<4x18xf32>
    %c0_2 = arith.constant 0 : index
    %c0_3 = arith.constant 0 : index
    %2 = vector.load %arg4[%c0_2, %c0_3] : memref<32x1xf32, #tpu.memory_space<vmem>>, vector<32x1xf32>
    %c0_4 = arith.constant 0 : index
    %c0_5 = arith.constant 0 : index
    %3 = vector.load %arg3[%c0_4, %c0_5] : memref<32x12xf32, #tpu.memory_space<vmem>>, vector<32x4xf32>
    %4 = vector.extract_strided_slice %1 {offsets = [0, 0], sizes = [4, 16], strides = [1, 1]} : vector<4x18xf32> to vector<4x16xf32>
    %cst = arith.constant dense<0.000000e+00> : vector<32x16xf32>
    %5 = tpu.matmul %3, %4, %cst {dimension_numbers = #tpu.dot_dimension_numbers<[1], [0], [0], [1], [0, 0, 1, 1], [], []>} : vector<32x4xf32>, vector<4x16xf32>, vector<32x16xf32> -> vector<32x16xf32>
    %c0_6 = arith.constant 0 : index
    %c4 = arith.constant 4 : index
    %6 = vector.load %arg3[%c0_6, %c4] : memref<32x12xf32, #tpu.memory_space<vmem>>, vector<32x4xf32>
    %7 = vector.extract_strided_slice %1 {offsets = [0, 1], sizes = [4, 16], strides = [1, 1]} : vector<4x18xf32> to vector<4x16xf32>
    %cst_7 = arith.constant dense<0.000000e+00> : vector<32x16xf32>
    %8 = tpu.matmul %6, %7, %cst_7 {dimension_numbers = #tpu.dot_dimension_numbers<[1], [0], [0], [1], [0, 0, 1, 1], [], []>} : vector<32x4xf32>, vector<4x16xf32>, vector<32x16xf32> -> vector<32x16xf32>
    %9 = arith.addf %5, %8 : vector<32x16xf32>
    %c0_8 = arith.constant 0 : index
    %c8 = arith.constant 8 : index
    %10 = vector.load %arg3[%c0_8, %c8] : memref<32x12xf32, #tpu.memory_space<vmem>>, vector<32x4xf32>
    %11 = vector.extract_strided_slice %1 {offsets = [0, 2], sizes = [4, 16], strides = [1, 1]} : vector<4x18xf32> to vector<4x16xf32>
    %cst_9 = arith.constant dense<0.000000e+00> : vector<32x16xf32>
    %12 = tpu.matmul %10, %11, %cst_9 {dimension_numbers = #tpu.dot_dimension_numbers<[1], [0], [0], [1], [0, 0, 1, 1], [], []>} : vector<32x4xf32>, vector<4x16xf32>, vector<32x16xf32> -> vector<32x16xf32>
    %13 = arith.addf %9, %12 : vector<32x16xf32>
    %14 = vector.broadcast %2 : vector<32x1xf32> to vector<32x16xf32>
    %15 = arith.addf %13, %14 : vector<32x16xf32>
    %c0_10 = arith.constant 0 : index
    %c0_11 = arith.constant 0 : index
    %c0_12 = arith.constant 0 : index
    %16 = vector.load %arg5[%c0_10, %c0_11, %c0_12] : memref<1x32x16xf32, #tpu.memory_space<vmem>>, vector<1x32x16xf32>
    %17 = vector.shape_cast %16 : vector<1x32x16xf32> to vector<32x16xf32>
    %18 = vector.shape_cast %15 : vector<32x16xf32> to vector<1x32x16xf32>
    tpu.vector_store %arg5[%c0_10, %c0_11, %c0_12], %18 {strides = array<i32>} : memref<1x32x16xf32, #tpu.memory_space<vmem>>, vector<1x32x16xf32>,
    return
  }
  func.func @transform_0(%arg0: i32, %arg1: i32) -> (i32, i32, i32) {
    %c0_i32 = arith.constant 0 : i32
    %c0_i32_0 = arith.constant 0 : i32
    return %arg0, %c0_i32, %arg1 : i32, i32, i32
  }
  func.func @transform_1(%arg0: i32, %arg1: i32) -> (i32, i32) {
    %c0_i32 = arith.constant 0 : i32
    %c0_i32_0 = arith.constant 0 : i32
    %c0_i32_1 = arith.constant 0 : i32
    return %c0_i32, %c0_i32_0 : i32, i32
  }
  func.func @transform_2(%arg0: i32, %arg1: i32) -> (i32, i32) {
    %c0_i32 = arith.constant 0 : i32
    %c0_i32_0 = arith.constant 0 : i32
    %c0_i32_1 = arith.constant 0 : i32
    return %c0_i32, %c0_i32_0 : i32, i32
  }
  func.func @transform_3(%arg0: i32, %arg1: i32) -> (i32, i32, i32) {
    %c0_i32 = arith.constant 0 : i32
    %c0_i32_0 = arith.constant 0 : i32
    return %arg0, %c0_i32, %arg1 : i32, i32, i32
  }
}

</mosaic_0001>

<llo_original>
// kernel: tile.8
$region0: #{tile.8}
  #allocation0 [shape = 's32[1]{0}', space=sflag, size = 0x4, scoped, tag = 'scoped memory for tile.8']
  %s0 = inlined_call_operand.vmem [shape: f32[8], index: 0, kind: input, shape index: {}]
  %s1 = inlined_call_operand.vmem [shape: f32[4,8], index: 1, kind: output, shape index: {}]
  // Predicated region
  $region2: #{tile.8} parent=0 // pred_check
    _
  $region3: #{tile.8} parent=0 // pred_check_branch
    %3 = sbr.rel (0) target = $region5
  $region4: #{tile.8} parent=0 // pred_region
    _
  $region5: #{tile.8} parent=0 // pred_fallthru
    _
  %v4 = vld [vmem:[%s0] ss:$0 sm:$0xff]
  %5 = vst [vmem:[%s1] sm:$0xf] %v4

// kernel: tile.0
$region0: #{tile.0}
  %s0 = inlined_call_operand.vmem [shape: f32[4,8], index: 0, kind: input, shape index: {}]
  %s1 = inlined_call_operand.vmem [shape: f32[32,1], index: 1, kind: output, shape index: {}]
  $region1: #{tile.0} parent=0
    #allocation0 [shape = 'u8[4096]{0}', space=vmem, size = 0x1000, scoped, tag = 'scoped mem for input reshape']
    %s3 = sshll.u32 1, 4
    %s4 = ssub.s32 %s3, 1
    %v5 = vld [vmem:[%s0] sm:%s4]
    %6 = vst [vmem:[#allocation0] sm:%s4] %v5
    %v7 = vld [vmem:[#allocation0] sm:$0xf]
    %vm8 = vcmask 7168
    %9 = vst.msk [vmem:[%s1] ss:$8 sm:$0xf] %vm8, %v7
    %v10 = vld [vmem:[#allocation0] sm:$0xf]
    %11 = vrot.lane.b32.xlu0 %v10, 127
    %v12 = vpop.permute.xlu0 %11
    %vm13 = vcmask 7168
    %s14 = scalar_lea.vmem %s1, 1
    %15 = vst.msk [vmem:[%s14] ss:$8 sm:$0xf] %vm13, %v12
    %v16 = vld [vmem:[#allocation0] sm:$0xf]
    %17 = vrot.lane.b32.xlu0 %v16, 126
    %v18 = vpop.permute.xlu0 %17
    %vm19 = vcmask 7168
    %s20 = scalar_lea.vmem %s1, 2
    %21 = vst.msk [vmem:[%s20] ss:$8 sm:$0xf] %vm19, %v18
    %v22 = vld [vmem:[#allocation0] sm:$0xf]
    %23 = vrot.lane.b32.xlu0 %v22, 125
    %v24 = vpop.permute.xlu0 %23
    %vm25 = vcmask 7168
    %s26 = scalar_lea.vmem %s1, 3
    %27 = vst.msk [vmem:[%s26] ss:$8 sm:$0xf] %vm25, %v24
    %v28 = vld [vmem:[#allocation0] sm:$0xf]
    %29 = vrot.lane.b32.xlu0 %v28, 124
    %v30 = vpop.permute.xlu0 %29
    %vm31 = vcmask 7168
    %s32 = scalar_lea.vmem %s1, 4
    %33 = vst.msk [vmem:[%s32] ss:$8 sm:$0xf] %vm31, %v30
    %v34 = vld [vmem:[#allocation0] sm:$0xf]
    %35 = vrot.lane.b32.xlu0 %v34, 123
    %v36 = vpop.permute.xlu0 %35
    %vm37 = vcmask 7168
    %s38 = scalar_lea.vmem %s1, 5
    %39 = vst.msk [vmem:[%s38] ss:$8 sm:$0xf] %vm37, %v36
    %v40 = vld [vmem:[#allocation0] sm:$0xf]
    %41 = vrot.lane.b32.xlu0 %v40, 122
    %v42 = vpop.permute.xlu0 %41
    %vm43 = vcmask 7168
    %s44 = scalar_lea.vmem %s1, 6
    %45 = vst.msk [vmem:[%s44] ss:$8 sm:$0xf] %vm43, %v42
    %v46 = vld [vmem:[#allocation0] sm:$0xf]
    %47 = vrot.lane.b32.xlu0 %v46, 121
    %v48 = vpop.permute.xlu0 %47
    %vm49 = vcmask 7168
    %s50 = scalar_lea.vmem %s1, 7
    %51 = vst.msk [vmem:[%s50] ss:$8 sm:$0xf] %vm49, %v48

// kernel: upsample_net_forward.1
$region0: #{upsample_net_forward.1}
  #allocation0 [shape = 'u32[]', space=smem, size = 0x4, offset = 0x4, fixed_abs, tag = 'smem constant byte address 0x4 - core index']
  #allocation1 [shape = 'u32[144,128]{1,0:T(1,128)}', space=vmem, size = 0x12000, scoped, tag = 'internal scratch']
  %s0 = inlined_call_operand.vmem [shape: f32[2,4,18], index: 0, kind: input, shape index: {}]
  %s1 = inlined_call_operand.vmem [shape: f32[32,12], index: 1, kind: input, shape index: {}]
  %s2 = inlined_call_operand.vmem [shape: f32[32,1], index: 2, kind: input, shape index: {}]
  %s3 = inlined_call_operand.vmem [shape: f32[2,32,16], index: 3, kind: output, shape index: {}]
  %s4 = sld [smem:[#allocation0]]
  $region45: #{upsample_net_forward.1} parent=0
    _
  %s6 = ssub.s32 1, %s4
  %s7 = scalar_select 0, %s6, %s4
  loop: start=0, step=1, limit=4
  $region2: #{upsample_net_forward.1} parent=0 // loop_pre_header
    _
  $region3: #{upsample_net_forward.1} parent=0 // loop_header
    %s9 = sphi 0, %s13
    %p10 = scmp.ge.s32.totalorder %s9, 4
    %s16 = sphi 0, %s28
    %s17 = sphi 0, %s24
    %s18 = sphi 0, %s16
    %s19 = sphi 0, %s17
    %s20 = sphi 0, %s18
    %s21 = sphi 0, %s19
    %s33 = sphi 0, %s35
    %s36 = sphi 0, %s33
    %s37 = sphi 0, %s36
    %s53 = sphi 0, %s37
    %s57 = sphi 0, %s57
    %s59 = sphi 0, %s57
    %s60 = sphi 0, %s59
    %s74 = sphi 0, %s60
    %s78 = sphi 0, %s78
    %s80 = sphi 0, %s78
    %s81 = sphi 0, %s80
    %s95 = sphi 0, %s81
    %s103 = sphi 0, %s105
    %s106 = sphi 0, %s103
    %s107 = sphi 0, %s106
    %s123 = sphi 0, %s107
  $region4: #{upsample_net_forward.1} parent=0 // loop_header_branch
    %12 = sbr.rel (%p10) target = $region8
  $region5: #{upsample_net_forward.1} parent=0 // loop_body
    %s14 = ssub.s32 %s9, 1
    %s15 = ssub.s32 %s9, 2
    %s22 = sadd.s32 1, %s17
    %p23 = scmp.ge.s32.totalorder %s22, 1
    %s24 = scalar_select %p23, 0, %s22
    %s25 = sadd.s32 1, %s16
    %s26 = scalar_select %p23, %s25, %s16
    %p27 = scmp.ge.s32.totalorder %s26, 2
    %s28 = scalar_select %p27, 0, %s26
    %s29 = ssub.s32 %s16, %s28
    %s30 = ssub.s32 %s17, %s24
    %s31 = sor.u32 %s29, %s30
    %p32 = scmp.eq.s32.totalorder %s31, 0
    %s34 = sadd.s32 %s33, 1
    %s35 = scalar_select %p32, %s33, %s34
    %p38 = pneg %p32
    %p39 = scmp.eq.s32.totalorder %s9, 1
    %p40 = por %p38, %p39
    %p41 = scmp.ne.s32.totalorder %s33, %s36
    %p42 = scmp.eq.s32.totalorder %s9, 0
    %p43 = por %p41, %p42
    %p44 = scmp.ne.s32.totalorder %s33, %s36
    %p45 = scmp.eq.s32.totalorder %s14, 1
    %p46 = por %p44, %p45
    %p47 = scmp.ne.s32.totalorder %s36, %s37
    %p48 = scmp.eq.s32.totalorder %s14, 0
    %p49 = por %p47, %p48
    %p50 = scmp.ne.s32.totalorder %s36, %s37
    %p51 = scmp.eq.s32.totalorder %s15, 1
    %p52 = por %p50, %p51
    %p54 = scmp.ne.s32.totalorder %s37, %s53
    %p55 = scmp.eq.s32.totalorder %s15, 0
    %p56 = por %p54, %p55
    %s58 = sadd.s32 %s57, 1
    %p61 = scmp.eq.s32.totalorder %s9, 1
    %p62 = scmp.ne.s32.totalorder %s57, %s59
    %p63 = scmp.eq.s32.totalorder %s9, 0
    %p64 = por %p62, %p63
    %p65 = scmp.ne.s32.totalorder %s57, %s59
    %p66 = scmp.eq.s32.totalorder %s14, 1
    %p67 = por %p65, %p66
    %p68 = scmp.ne.s32.totalorder %s59, %s60
    %p69 = scmp.eq.s32.totalorder %s14, 0
    %p70 = por %p68, %p69
    %p71 = scmp.ne.s32.totalorder %s59, %s60
    %p72 = scmp.eq.s32.totalorder %s15, 1
    %p73 = por %p71, %p72
    %p75 = scmp.ne.s32.totalorder %s60, %s74
    %p76 = scmp.eq.s32.totalorder %s15, 0
    %p77 = por %p75, %p76
    %s79 = sadd.s32 %s78, 1
    %p82 = scmp.eq.s32.totalorder %s9, 1
    %p83 = scmp.ne.s32.totalorder %s78, %s80
    %p84 = scmp.eq.s32.totalorder %s9, 0
    %p85 = por %p83, %p84
    %p86 = scmp.ne.s32.totalorder %s78, %s80
    %p87 = scmp.eq.s32.totalorder %s14, 1
    %p88 = por %p86, %p87
    %p89 = scmp.ne.s32.totalorder %s80, %s81
    %p90 = scmp.eq.s32.totalorder %s14, 0
    %p91 = por %p89, %p90
    %p92 = scmp.ne.s32.totalorder %s80, %s81
    %p93 = scmp.eq.s32.totalorder %s15, 1
    %p94 = por %p92, %p93
    %p96 = scmp.ne.s32.totalorder %s81, %s95
    %p97 = scmp.eq.s32.totalorder %s15, 0
    %p98 = por %p96, %p97
    %s99 = ssub.s32 %s16, %s28
    %s100 = ssub.s32 %s17, %s24
    %s101 = sor.u32 %s99, %s100
    %p102 = scmp.eq.s32.totalorder %s101, 0
    %s104 = sadd.s32 %s103, 1
    %s105 = scalar_select %p102, %s103, %s104
    %p108 = pneg %p102
    %p109 = scmp.eq.s32.totalorder %s9, 1
    %p110 = por %p108, %p109
    %p111 = scmp.ne.s32.totalorder %s103, %s106
    %p112 = scmp.eq.s32.totalorder %s9, 0
    %p113 = por %p111, %p112
    %p114 = scmp.ne.s32.totalorder %s103, %s106
    %p115 = scmp.eq.s32.totalorder %s14, 1
    %p116 = por %p114, %p115
    %p117 = scmp.ne.s32.totalorder %s106, %s107
    %p118 = scmp.eq.s32.totalorder %s14, 0
    %p119 = por %p117, %p118
    %p120 = scmp.ne.s32.totalorder %s106, %s107
    %p121 = scmp.eq.s32.totalorder %s15, 1
    %p122 = por %p120, %p121
    %p124 = scmp.ne.s32.totalorder %s107, %s123
    %p125 = scmp.eq.s32.totalorder %s15, 0
    %p126 = por %p124, %p125
    %p127 = scmp.le.s32.totalorder 1, %s9
    %p128 = scmp.lt.s32.totalorder %s9, 3
    %p129 = pnand %p127, %p128
    %p130 = pneg %p129
    // Predicated region
    $region9: #{upsample_net_forward.1} parent=5 // pred_check
      _
    $region10: #{upsample_net_forward.1} parent=5 // pred_check_branch
      %132 = sbr.rel (%p129) target = $region12
    $region11: #{upsample_net_forward.1} parent=5 // pred_region
      %s133 = ssub.s32 %s9, 1
      // Predicated region
      $region13: #{upsample_net_forward.1} parent=11 // pred_check
        %p134 = pneg %p70
      $region14: #{upsample_net_forward.1} parent=11 // pred_check_branch
        %136 = sbr.rel (%p134) target = $region16
      $region15: #{upsample_net_forward.1} parent=11 // pred_region
        _
      $region16: #{upsample_net_forward.1} parent=11 // pred_fallthru
        _
      // Predicated region
      $region17: #{upsample_net_forward.1} parent=11 // pred_check
        %p137 = pneg %p91
      $region18: #{upsample_net_forward.1} parent=11 // pred_check_branch
        %139 = sbr.rel (%p137) target = $region20
      $region19: #{upsample_net_forward.1} parent=11 // pred_region
        _
      $region20: #{upsample_net_forward.1} parent=11 // pred_fallthru
        _
    $region12: #{upsample_net_forward.1} parent=5 // pred_fallthru
      _
    %p140 = scmp.lt.s32.totalorder %s9, 2
    // Predicated region
    $region21: #{upsample_net_forward.1} parent=5 // pred_check
      %p141 = pneg %p140
    $region22: #{upsample_net_forward.1} parent=5 // pred_check_branch
      %143 = sbr.rel (%p141) target = $region24
    $region23: #{upsample_net_forward.1} parent=5 // pred_region
      // Predicated region
      $region25: #{upsample_net_forward.1} parent=23 // pred_check
        %p144 = pneg %p43
      $region26: #{upsample_net_forward.1} parent=23 // pred_check_branch
        %146 = sbr.rel (%p144) target = $region28
      $region27: #{upsample_net_forward.1} parent=23 // pred_region
        %p147 = scmp.lt.s32.totalorder %s16, 1
        %s148 = scalar_select %p147, %s16, 1
        %p149 = scmp.lt.s32.totalorder %s17, 0
        %s150 = scalar_select %p149, %s17, 0
        %s151 = sadd.s32 %s150, %s148
        %s152 = smul.addr %s151, 4
        %s153 = scalar_lea.vmem %s0, %s152
      $region28: #{upsample_net_forward.1} parent=23 // pred_fallthru
        _
    $region24: #{upsample_net_forward.1} parent=5 // pred_fallthru
      _
    %p154 = scmp.le.s32.totalorder 1, %s9
    %p155 = scmp.lt.s32.totalorder %s9, 3
    %p156 = pnand %p154, %p155
    %p157 = pneg %p156
    // Predicated region
    $region29: #{upsample_net_forward.1} parent=5 // pred_check
      _
    $region30: #{upsample_net_forward.1} parent=5 // pred_check_branch
      %159 = sbr.rel (%p156) target = $region32
    $region31: #{upsample_net_forward.1} parent=5 // pred_region
      %s160 = ssub.s32 %s9, 1
      %p161 = scmp.lt.s32.totalorder %s18, 1
      %s162 = scalar_select %p161, %s18, 1
      %p163 = scmp.lt.s32.totalorder %s19, 0
      %s164 = scalar_select %p163, %s19, 0
      %s165 = sadd.s32 %s164, %s162
      %s166 = smul.addr %s165, 4
      %s167 = scalar_lea.vmem %s0, %s166
      %p168 = pneg %p49
      %p169 = pneg %p46
      %p170 = pneg %p70
      %p171 = pneg %p67
      %p172 = pneg %p91
      %p173 = pneg %p88
      %p174 = pneg %p119
      %p175 = pneg %p116
      %p176 = scmp.lt.s32.totalorder %s18, 1
      %s177 = scalar_select %p176, %s18, 1
      %p178 = scmp.lt.s32.totalorder %s19, 0
      %s179 = scalar_select %p178, %s19, 0
      %s180 = smul.addr %s177, 4
      %s181 = sadd.s32 %s179, %s180
      %s182 = smul.addr %s181, 8
      %s183 = scalar_lea.vmem %s3, %s182
      %p184 = scmp.lt.s32.totalorder %s18, 1
      %s185 = scalar_select %p184, %s18, 1
      %p186 = scmp.lt.s32.totalorder %s19, 0
      %s187 = scalar_select %p186, %s19, 0
      %s188 = sadd.s32 %s187, %s185
      %s189 = smul.addr %s188, 4
      %s190 = scalar_lea.vmem %s0, %s189
      %p191 = scmp.lt.s32.totalorder %s18, 1
      %s192 = scalar_select %p191, %s18, 1
      %p193 = scmp.lt.s32.totalorder %s19, 0
      %s194 = scalar_select %p193, %s19, 0
      %s195 = smul.addr %s192, 4
      %s196 = sadd.s32 %s194, %s195
      %s197 = smul.addr %s196, 8
      %s198 = scalar_lea.vmem %s3, %s197
      %v199 = vld [vmem:[%s190] sm:$0xf]
      %v200 = vld [vmem:[%s2] sm:$0xff]
      %v201 = vld [vmem:[%s2 + $0x8] sm:$0xff]
      %v202 = vld [vmem:[%s2 + $0x10] sm:$0xff]
      %v203 = vld [vmem:[%s2 + $0x18] sm:$0xff]
      %v204 = vld [vmem:[%s1] sm:$0xff]
      %v205 = vld [vmem:[%s1 + $0x8] sm:$0xff]
      %v206 = vld [vmem:[%s1 + $0x10] sm:$0xff]
      %v207 = vld [vmem:[%s1 + $0x18] sm:$0xff]
      %212 = vrot.lane.b32.xlu0 %v204, 124
      %v213 = vpop.permute.xlu0 %212
      %214 = vrot.lane.b32.xlu0 %v205, 124
      %v215 = vpop.permute.xlu0 %214
      %216 = vrot.lane.b32.xlu0 %v206, 124
      %v217 = vpop.permute.xlu0 %216
      %218 = vrot.lane.b32.xlu0 %v207, 124
      %v219 = vpop.permute.xlu0 %218
      %221 = vrot.lane.b32.xlu0 %v199, 127
      %v222 = vpop.permute.xlu0 %221
      %vm223 = vcmask 31744
      %v224 = vsel %vm223, %v213, 0
      %v226 = vsel %vm223, %v215, 0
      %v228 = vsel %vm223, %v217, 0
      %v230 = vsel %vm223, %v219, 0
      %vm232 = vcmask 1043456
      %v233 = vsel %vm232, %v222, 0
      %235 = vmatprep.subr.mxu0 0.0
      %236 = vmatpush1.msra.mxu0 0.0
      %237 = vmatprep.subr.mxu0 0.0
      %238 = vmatpush1.msra.mxu0 0.0
      %239 = vmatprep.subr.mxu0 0.0
      %240 = vmatpush1.msra.mxu0 0.0
      %241 = vmatprep.subr.mxu0 0.0
      %242 = vmatpush1.msra.mxu0 0.0
      %243 = vmatprep.subr.mxu0 0.0
      %244 = vmatpush1.msra.mxu0 0.0
      %245 = vmatprep.subr.mxu0 0.0
      %246 = vmatpush1.msra.mxu0 0.0
      %247 = vmatprep.subr.mxu0 0.0
      %248 = vmatpush1.msra.mxu0 0.0
      %249 = vmatprep.subr.mxu0 0.0
      %250 = vmatpush1.msra.mxu0 0.0
      %251 = vmatprep.subr.mxu0 0.0
      %252 = vmatpush1.msra.mxu0 0.0
      %253 = vmatprep.subr.mxu0 0.0
      %254 = vmatpush1.msra.mxu0 0.0
      %255 = vmatprep.subr.mxu0 0.0
      %256 = vmatpush1.msra.mxu0 0.0
      %257 = vmatprep.subr.mxu0 0.0
      %258 = vmatpush1.msra.mxu0 0.0
      %259 = vmatprep.subr.mxu0 0.0
      %260 = vmatpush1.msra.mxu0 0.0
      %261 = vmatprep.subr.mxu0 0.0
      %262 = vmatpush1.msra.mxu0 0.0
      %263 = vmatprep.subr.mxu0 0.0
      %264 = vmatpush1.msra.mxu0 0.0
      %265 = vmatprep.subr.mxu0 0.0
      %266 = vmatpush1.msra.mxu0 %v233
      %267 = vmatprep.subr.mxu0 0.0
      %268 = vmatpush2.msra.mxu0 0.0
      %269 = vmatprep.subr.mxu0 0.0
      %270 = vmatpush2.msra.mxu0 0.0
      %271 = vmatprep.subr.mxu0 0.0
      %272 = vmatpush2.msra.mxu0 0.0
      %273 = vmatprep.subr.mxu0 0.0
      %274 = vmatpush2.msra.mxu0 0.0
      %275 = vmatprep.subr.mxu0 0.0
      %276 = vmatpush2.msra.mxu0 0.0
      %277 = vmatprep.subr.mxu0 0.0
      %278 = vmatpush2.msra.mxu0 0.0
      %279 = vmatprep.subr.mxu0 0.0
      %280 = vmatpush2.msra.mxu0 0.0
      %281 = vmatprep.subr.mxu0 0.0
      %282 = vmatpush2.msra.mxu0 0.0
      %283 = vmatprep.subr.mxu0 0.0
      %284 = vmatpush2.msra.mxu0 0.0
      %285 = vmatprep.subr.mxu0 0.0
      %286 = vmatpush2.msra.mxu0 0.0
      %287 = vmatprep.subr.mxu0 0.0
      %288 = vmatpush2.msra.mxu0 0.0
      %289 = vmatprep.subr.mxu0 0.0
      %290 = vmatpush2.msra.mxu0 0.0
      %291 = vmatprep.subr.mxu0 0.0
      %292 = vmatpush2.msra.mxu0 0.0
      %293 = vmatprep.subr.mxu0 0.0
      %294 = vmatpush2.msra.mxu0 0.0
      %295 = vmatprep.subr.mxu0 0.0
      %296 = vmatpush2.msra.mxu0 0.0
      %297 = vmatprep.subr.mxu0 0.0
      %298 = vmatpush2.msra.mxu0 0.0
      %299 = vmatprep.mubr.f32.mxu0 0.0
      %300 = vmatmul.mubr.f32.gmra.mxu0 %v224
      %v301 = vpop.f32.mrf.mxu0
      %v302 = vadd.f32 0.0, %v301
      %v303 = vpop.f32.mrf.mxu0
      %304 = vmatprep.mubr.f32.mxu0 0.0
      %305 = vmatmul.mubr.f32.gmra.mxu0 %v226
      %v306 = vpop.f32.mrf.mxu0
      %v307 = vadd.f32 0.0, %v306
      %v308 = vpop.f32.mrf.mxu0
      %309 = vmatprep.mubr.f32.mxu0 0.0
      %310 = vmatmul.mubr.f32.gmra.mxu0 %v228
      %v311 = vpop.f32.mrf.mxu0
      %v312 = vadd.f32 0.0, %v311
      %v313 = vpop.f32.mrf.mxu0
      %314 = vmatprep.mubr.f32.mxu0 0.0
      %315 = vmatmul.mubr.f32.gmra.mxu0 %v230
      %v316 = vpop.f32.mrf.mxu0
      %v317 = vadd.f32 0.0, %v316
      %v318 = vpop.f32.mrf.mxu0
      %319 = vdwg.mxu0
      %v320 = vsel %vm223, %v204, 0
      %v322 = vsel %vm223, %v205, 0
      %v324 = vsel %vm223, %v206, 0
      %v326 = vsel %vm223, %v207, 0
      %v328 = vsel %vm232, %v199, 0
      %330 = vmatprep.subr.mxu0 0.0
      %331 = vmatpush1.msra.mxu0 0.0
      %332 = vmatprep.subr.mxu0 0.0
      %333 = vmatpush1.msra.mxu0 0.0
      %334 = vmatprep.subr.mxu0 0.0
      %335 = vmatpush1.msra.mxu0 0.0
      %336 = vmatprep.subr.mxu0 0.0
      %337 = vmatpush1.msra.mxu0 0.0
      %338 = vmatprep.subr.mxu0 0.0
      %339 = vmatpush1.msra.mxu0 0.0
      %340 = vmatprep.subr.mxu0 0.0
      %341 = vmatpush1.msra.mxu0 0.0
      %342 = vmatprep.subr.mxu0 0.0
      %343 = vmatpush1.msra.mxu0 0.0
      %344 = vmatprep.subr.mxu0 0.0
      %345 = vmatpush1.msra.mxu0 0.0
      %346 = vmatprep.subr.mxu0 0.0
      %347 = vmatpush1.msra.mxu0 0.0
      %348 = vmatprep.subr.mxu0 0.0
      %349 = vmatpush1.msra.mxu0 0.0
      %350 = vmatprep.subr.mxu0 0.0
      %351 = vmatpush1.msra.mxu0 0.0
      %352 = vmatprep.subr.mxu0 0.0
      %353 = vmatpush1.msra.mxu0 0.0
      %354 = vmatprep.subr.mxu0 0.0
      %355 = vmatpush1.msra.mxu0 0.0
      %356 = vmatprep.subr.mxu0 0.0
      %357 = vmatpush1.msra.mxu0 0.0
      %358 = vmatprep.subr.mxu0 0.0
      %359 = vmatpush1.msra.mxu0 0.0
      %360 = vmatprep.subr.mxu0 0.0
      %361 = vmatpush1.msra.mxu0 %v328
      %362 = vmatprep.subr.mxu0 0.0
      %363 = vmatpush2.msra.mxu0 0.0
      %364 = vmatprep.subr.mxu0 0.0
      %365 = vmatpush2.msra.mxu0 0.0
      %366 = vmatprep.subr.mxu0 0.0
      %367 = vmatpush2.msra.mxu0 0.0
      %368 = vmatprep.subr.mxu0 0.0
      %369 = vmatpush2.msra.mxu0 0.0
      %370 = vmatprep.subr.mxu0 0.0
      %371 = vmatpush2.msra.mxu0 0.0
      %372 = vmatprep.subr.mxu0 0.0
      %373 = vmatpush2.msra.mxu0 0.0
      %374 = vmatprep.subr.mxu0 0.0
      %375 = vmatpush2.msra.mxu0 0.0
      %376 = vmatprep.subr.mxu0 0.0
      %377 = vmatpush2.msra.mxu0 0.0
      %378 = vmatprep.subr.mxu0 0.0
      %379 = vmatpush2.msra.mxu0 0.0
      %380 = vmatprep.subr.mxu0 0.0
      %381 = vmatpush2.msra.mxu0 0.0
      %382 = vmatprep.subr.mxu0 0.0
      %383 = vmatpush2.msra.mxu0 0.0
      %384 = vmatprep.subr.mxu0 0.0
      %385 = vmatpush2.msra.mxu0 0.0
      %386 = vmatprep.subr.mxu0 0.0
      %387 = vmatpush2.msra.mxu0 0.0
      %388 = vmatprep.subr.mxu0 0.0
      %389 = vmatpush2.msra.mxu0 0.0
      %390 = vmatprep.subr.mxu0 0.0
      %391 = vmatpush2.msra.mxu0 0.0
      %392 = vmatprep.subr.mxu0 0.0
      %393 = vmatpush2.msra.mxu0 0.0
      %394 = vmatprep.mubr.f32.mxu0 0.0
      %395 = vmatmul.mubr.f32.gmra.mxu0 %v320
      %v396 = vpop.f32.mrf.mxu0
      %v397 = vadd.f32 %v302, %v396
      %v398 = vpop.f32.mrf.mxu0
      %399 = vmatprep.mubr.f32.mxu0 0.0
      %400 = vmatmul.mubr.f32.gmra.mxu0 %v322
      %v401 = vpop.f32.mrf.mxu0
      %v402 = vadd.f32 %v307, %v401
      %v403 = vpop.f32.mrf.mxu0
      %404 = vmatprep.mubr.f32.mxu0 0.0
      %405 = vmatmul.mubr.f32.gmra.mxu0 %v324
      %v406 = vpop.f32.mrf.mxu0
      %v407 = vadd.f32 %v312, %v406
      %v408 = vpop.f32.mrf.mxu0
      %409 = vmatprep.mubr.f32.mxu0 0.0
      %410 = vmatmul.mubr.f32.gmra.mxu0 %v326
      %v411 = vpop.f32.mrf.mxu0
      %v412 = vadd.f32 %v317, %v411
      %v413 = vpop.f32.mrf.mxu0
      %414 = vdwg.mxu0
      %415 = vrot.lane.b32.xlu0 %v204, 120
      %v416 = vpop.permute.xlu0 %415
      %417 = vrot.lane.b32.xlu0 %v205, 120
      %v418 = vpop.permute.xlu0 %417
      %419 = vrot.lane.b32.xlu0 %v206, 120
      %v420 = vpop.permute.xlu0 %419
      %421 = vrot.lane.b32.xlu0 %v207, 120
      %v422 = vpop.permute.xlu0 %421
      %423 = vrot.lane.b32.xlu0 %v199, 126
      %v424 = vpop.permute.xlu0 %423
      %v425 = vsel %vm223, %v416, 0
      %v427 = vsel %vm223, %v418, 0
      %v429 = vsel %vm223, %v420, 0
      %v431 = vsel %vm223, %v422, 0
      %v433 = vsel %vm232, %v424, 0
      %435 = vmatprep.subr.mxu0 0.0
      %436 = vmatpush1.msra.mxu0 0.0
      %437 = vmatprep.subr.mxu0 0.0
      %438 = vmatpush1.msra.mxu0 0.0
      %439 = vmatprep.subr.mxu0 0.0
      %440 = vmatpush1.msra.mxu0 0.0
      %441 = vmatprep.subr.mxu0 0.0
      %442 = vmatpush1.msra.mxu0 0.0
      %443 = vmatprep.subr.mxu0 0.0
      %444 = vmatpush1.msra.mxu0 0.0
      %445 = vmatprep.subr.mxu0 0.0
      %446 = vmatpush1.msra.mxu0 0.0
      %447 = vmatprep.subr.mxu0 0.0
      %448 = vmatpush1.msra.mxu0 0.0
      %449 = vmatprep.subr.mxu0 0.0
      %450 = vmatpush1.msra.mxu0 0.0
      %451 = vmatprep.subr.mxu0 0.0
      %452 = vmatpush1.msra.mxu0 0.0
      %453 = vmatprep.subr.mxu0 0.0
      %454 = vmatpush1.msra.mxu0 0.0
      %455 = vmatprep.subr.mxu0 0.0
      %456 = vmatpush1.msra.mxu0 0.0
      %457 = vmatprep.subr.mxu0 0.0
      %458 = vmatpush1.msra.mxu0 0.0
      %459 = vmatprep.subr.mxu0 0.0
      %460 = vmatpush1.msra.mxu0 0.0
      %461 = vmatprep.subr.mxu0 0.0
      %462 = vmatpush1.msra.mxu0 0.0
      %463 = vmatprep.subr.mxu0 0.0
      %464 = vmatpush1.msra.mxu0 0.0
      %465 = vmatprep.subr.mxu0 0.0
      %466 = vmatpush1.msra.mxu0 %v433
      %467 = vmatprep.subr.mxu0 0.0
      %468 = vmatpush2.msra.mxu0 0.0
      %469 = vmatprep.subr.mxu0 0.0
      %470 = vmatpush2.msra.mxu0 0.0
      %471 = vmatprep.subr.mxu0 0.0
      %472 = vmatpush2.msra.mxu0 0.0
      %473 = vmatprep.subr.mxu0 0.0
      %474 = vmatpush2.msra.mxu0 0.0
      %475 = vmatprep.subr.mxu0 0.0
      %476 = vmatpush2.msra.mxu0 0.0
      %477 = vmatprep.subr.mxu0 0.0
      %478 = vmatpush2.msra.mxu0 0.0
      %479 = vmatprep.subr.mxu0 0.0
      %480 = vmatpush2.msra.mxu0 0.0
      %481 = vmatprep.subr.mxu0 0.0
      %482 = vmatpush2.msra.mxu0 0.0
      %483 = vmatprep.subr.mxu0 0.0
      %484 = vmatpush2.msra.mxu0 0.0
      %485 = vmatprep.subr.mxu0 0.0
      %486 = vmatpush2.msra.mxu0 0.0
      %487 = vmatprep.subr.mxu0 0.0
      %488 = vmatpush2.msra.mxu0 0.0
      %489 = vmatprep.subr.mxu0 0.0
      %490 = vmatpush2.msra.mxu0 0.0
      %491 = vmatprep.subr.mxu0 0.0
      %492 = vmatpush2.msra.mxu0 0.0
      %493 = vmatprep.subr.mxu0 0.0
      %494 = vmatpush2.msra.mxu0 0.0
      %495 = vmatprep.subr.mxu0 0.0
      %496 = vmatpush2.msra.mxu0 0.0
      %497 = vmatprep.subr.mxu0 0.0
      %498 = vmatpush2.msra.mxu0 0.0
      %499 = vmatprep.mubr.f32.mxu0 0.0
      %500 = vmatmul.mubr.f32.gmra.mxu0 %v425
      %v501 = vpop.f32.mrf.mxu0
      %v502 = vadd.f32 0.0, %v501
      %v503 = vpop.f32.mrf.mxu0
      %504 = vmatprep.mubr.f32.mxu0 0.0
      %505 = vmatmul.mubr.f32.gmra.mxu0 %v427
      %v506 = vpop.f32.mrf.mxu0
      %v507 = vadd.f32 0.0, %v506
      %v508 = vpop.f32.mrf.mxu0
      %509 = vmatprep.mubr.f32.mxu0 0.0
      %510 = vmatmul.mubr.f32.gmra.mxu0 %v429
      %v511 = vpop.f32.mrf.mxu0
      %v512 = vadd.f32 0.0, %v511
      %v513 = vpop.f32.mrf.mxu0
      %514 = vmatprep.mubr.f32.mxu0 0.0
      %515 = vmatmul.mubr.f32.gmra.mxu0 %v431
      %v516 = vpop.f32.mrf.mxu0
      %v517 = vadd.f32 0.0, %v516
      %v518 = vpop.f32.mrf.mxu0
      %519 = vdwg.mxu0
      %v520 = vadd.f32 %v397, %v502
      %v521 = vadd.f32 %v402, %v507
      %v522 = vadd.f32 %v407, %v512
      %v523 = vadd.f32 %v412, %v517
      %525 = vset.pattern.permute.xlu0 0
      %526 = vperm.xlu0 %525, %v200
      %v527 = vpop.permute.xlu0 %526
      %530 = vset.pattern.permute.xlu0 0
      %531 = vperm.xlu0 %530, %v201
      %v532 = vpop.permute.xlu0 %531
      %535 = vset.pattern.permute.xlu0 0
      %536 = vperm.xlu0 %535, %v202
      %v537 = vpop.permute.xlu0 %536
      %540 = vset.pattern.permute.xlu0 0
      %541 = vperm.xlu0 %540, %v203
      %v542 = vpop.permute.xlu0 %541
      %v544 = vadd.f32 %v520, %v527
      %v545 = vadd.f32 %v521, %v532
      %v546 = vadd.f32 %v522, %v537
      %v547 = vadd.f32 %v523, %v542
      %vm548 = vcmask 130048
      %549 = vst.msk [vmem:[%s198] sm:$0xff] %vm548, %v544
      %550 = vst.msk [vmem:[%s198 + $0x8] sm:$0xff] %vm548, %v545
      %551 = vst.msk [vmem:[%s198 + $0x10] sm:$0xff] %vm548, %v546
      %552 = vst.msk [vmem:[%s198 + $0x18] sm:$0xff] %vm548, %v547
      %p553 = scmp.lt.s32.totalorder %s18, 1
      %s554 = scalar_select %p553, %s18, 1
      %p555 = scmp.lt.s32.totalorder %s19, 0
      %s556 = scalar_select %p555, %s19, 0
      %s557 = smul.addr %s554, 4
      %s558 = sadd.s32 %s556, %s557
      %s559 = smul.addr %s558, 8
      %s560 = scalar_lea.vmem %s3, %s559
      // Predicated region
      $region33: #{upsample_net_forward.1} parent=31 // pred_check
        %p561 = pneg %p116
      $region34: #{upsample_net_forward.1} parent=31 // pred_check_branch
        %563 = sbr.rel (%p561) target = $region36
      $region35: #{upsample_net_forward.1} parent=31 // pred_region
        _
      $region36: #{upsample_net_forward.1} parent=31 // pred_fallthru
        _
    $region32: #{upsample_net_forward.1} parent=5 // pred_fallthru
      _
    %p564 = scmp.le.s32.totalorder 2, %s9
    // Predicated region
    $region37: #{upsample_net_forward.1} parent=5 // pred_check
      %p565 = pneg %p564
    $region38: #{upsample_net_forward.1} parent=5 // pred_check_branch
      %567 = sbr.rel (%p565) target = $region40
    $region39: #{upsample_net_forward.1} parent=5 // pred_region
      %s568 = ssub.s32 %s9, 2
      // Predicated region
      $region41: #{upsample_net_forward.1} parent=39 // pred_check
        %p569 = pneg %p122
      $region42: #{upsample_net_forward.1} parent=39 // pred_check_branch
        %571 = sbr.rel (%p569) target = $region44
      $region43: #{upsample_net_forward.1} parent=39 // pred_region
        %p572 = scmp.lt.s32.totalorder %s20, 1
        %s573 = scalar_select %p572, %s20, 1
        %p574 = scmp.lt.s32.totalorder %s21, 0
        %s575 = scalar_select %p574, %s21, 0
        %s576 = smul.addr %s573, 4
        %s577 = sadd.s32 %s575, %s576
        %s578 = smul.addr %s577, 8
        %s579 = scalar_lea.vmem %s3, %s578
      $region44: #{upsample_net_forward.1} parent=39 // pred_fallthru
        _
    $region40: #{upsample_net_forward.1} parent=5 // pred_fallthru
      _
  $region6: #{upsample_net_forward.1} parent=0 // loop_footer
    %s13 = sadd.s32 1, %s9
  $region7: #{upsample_net_forward.1} parent=0 // loop_footer_branch
    %8 = sbr.rel target = $region3
  $region8: #{upsample_net_forward.1} parent=0 // loop_exit
    _

</llo_original>
